<compile_context>
chip_gen: v5e
topology: v5e:2x2
jax: 0.10.0
libtpu: 0.0.40
codegen_flags: <defaults>
</compile_context>

<pallas_src>
import jax
import jax.numpy as jnp
from jax.experimental import pallas as pl
from jax.experimental.pallas import tpu as pltpu


# ---------------------------------------------------------------------------
# Path 1: small tables -- VMEM-resident tables + one-hot gather on the MXU.
# ---------------------------------------------------------------------------

def _mf_resident_kernel(uids_ref, iids_ref, ut_ref, it_ref, out_ref):
    # uids_ref / iids_ref: (1, B_TILE) int32 id tiles (batch on lanes)
    # ut_ref: (num_users, D) bf16 user table (VMEM resident, single-buffered)
    # it_ref: (num_items, D) bf16 item table (VMEM resident, single-buffered)
    # out_ref: (1, B_TILE) f32 ratings row (lane dense)
    uids = uids_ref[...]
    iids = iids_ref[...]
    ut = ut_ref[...]
    it = it_ref[...]

    num_users = ut.shape[0]
    num_items = it.shape[0]
    b_tile = uids.shape[1]

    # One-hot gather operands: onehot[n, b] = (n == id[b]).  0/1 is exact in
    # bf16, so the gather itself is exact; bf16 halves vreg/VMEM footprint.
    u_oh = (jax.lax.broadcasted_iota(jnp.int32, (num_users, b_tile), 0)
            == uids).astype(ut.dtype)
    i_oh = (jax.lax.broadcasted_iota(jnp.int32, (num_items, b_tile), 0)
            == iids).astype(it.dtype)

    # Contract over the table row axis (axis 0 of both operands): transposed-
    # LHS matmul handled natively by the MXU, so no host-side table transpose.
    # Result is (D, B_TILE): dim on sublanes, batch on lanes.
    dn = (((0,), (0,)), ((), ()))
    ue = jax.lax.dot_general(ut, u_oh, dn, preferred_element_type=jnp.float32)
    ie = jax.lax.dot_general(it, i_oh, dn, preferred_element_type=jnp.float32)

    # VPU elementwise product, sublane reduction -> (1, B_TILE) lane-dense row.
    out_ref[...] = jnp.sum(ue * ie, axis=0, keepdims=True)


def _mf_resident_forward(user_table, item_table, uids_2d, iids_2d,
                         num_tiles, b_tile):
    num_users, dim = user_table.shape
    num_items, _ = item_table.shape
    padded = num_tiles * b_tile

    # bf16 resident tables: halves VMEM + DMA and matches what the MXU would
    # use anyway at default precision.
    ut = user_table.astype(jnp.bfloat16)
    it = item_table.astype(jnp.bfloat16)

    # Explicit VMEM budget: single-buffered tables + bf16 one-hots +
    # (D, B_TILE) f32 intermediates + double-buffered id/out tiles, 2x slack.
    table_bytes = (num_users + num_items) * dim * 2
    onehot_bytes = (num_users + num_items) * b_tile * 2
    inter_bytes = 2 * dim * b_tile * 4
    io_bytes = 2 * 2 * (3 * b_tile * 4)
    vmem_limit = int(min(
        2 * (table_bytes + onehot_bytes + inter_bytes + io_bytes) + (4 << 20),
        96 << 20))

    cost = pl.CostEstimate(
        flops=2 * (num_users + num_items) * padded * dim + 3 * padded * dim,
        transcendentals=0,
        bytes_accessed=table_bytes + 2 * padded * 4 + padded * 4)

    grid_spec = pltpu.PrefetchScalarGridSpec(
        num_scalar_prefetch=0,
        grid=(num_tiles,),
        in_specs=[
            pl.BlockSpec((1, b_tile), lambda i: (0, i)),        # user id tile
            pl.BlockSpec((1, b_tile), lambda i: (0, i)),        # item id tile
            # Constant index_map -> DMA'd once; single-buffered (double-
            # buffering a constant block only doubles its VMEM reservation).
            pl.BlockSpec((num_users, dim), lambda i: (0, 0),
                         pipeline_mode=pl.Buffered(1)),
            pl.BlockSpec((num_items, dim), lambda i: (0, 0),
                         pipeline_mode=pl.Buffered(1)),
        ],
        out_specs=pl.BlockSpec((1, b_tile), lambda i: (0, i)),
    )

    out = pl.pallas_call(
        _mf_resident_kernel,
        out_shape=jax.ShapeDtypeStruct((1, padded), jnp.float32),
        grid_spec=grid_spec,
        compiler_params=pltpu.CompilerParams(
            dimension_semantics=("parallel",),
            vmem_limit_bytes=vmem_limit),
        cost_estimate=cost,
    )(uids_2d, iids_2d, ut, it)
    return out.reshape(padded)


# ---------------------------------------------------------------------------
# Path 2: large tables -- tables stay in HBM, per-row DMA gather.
# ---------------------------------------------------------------------------

def _mf_gather_kernel(uids_ref, iids_ref, ut_hbm, it_hbm, out_ref,
                      ubuf, ibuf, sems):
    # uids_ref / iids_ref: (padded,) int32 in SMEM (scalar-prefetched)
    # ut_hbm / it_hbm: full (N, D) embedding tables left in HBM
    # out_ref: (B_TILE, 1) f32
    # ubuf / ibuf: (B_TILE, D) VMEM gather buffers; sems: (2,) DMA semaphores
    t = pl.program_id(0)
    b_tile = ubuf.shape[0]
    base = t * b_tile

    def start_row(b, carry):
        uid = uids_ref[base + b]
        iid = iids_ref[base + b]
        pltpu.make_async_copy(ut_hbm.at[pl.ds(uid, 1), :],
                              ubuf.at[pl.ds(b, 1), :], sems.at[0]).start()
        pltpu.make_async_copy(it_hbm.at[pl.ds(iid, 1), :],
                              ibuf.at[pl.ds(b, 1), :], sems.at[1]).start()
        return carry

    jax.lax.fori_loop(0, b_tile, start_row, 0)

    def wait_row(b, carry):
        # All row copies have identical byte counts, so waiting B_TILE times
        # per semaphore drains every outstanding row DMA.
        pltpu.make_async_copy(ut_hbm.at[pl.ds(0, 1), :],
                              ubuf.at[pl.ds(b, 1), :], sems.at[0]).wait()
        pltpu.make_async_copy(it_hbm.at[pl.ds(0, 1), :],
                              ibuf.at[pl.ds(b, 1), :], sems.at[1]).wait()
        return carry

    jax.lax.fori_loop(0, b_tile, wait_row, 0)

    prod = ubuf[...].astype(jnp.float32) * ibuf[...].astype(jnp.float32)
    out_ref[...] = jnp.sum(prod, axis=1, keepdims=True)


def _mf_gather_forward(user_table, item_table, uids_flat, iids_flat,
                       num_tiles, b_tile):
    num_users, dim = user_table.shape
    num_items, _ = item_table.shape
    padded = num_tiles * b_tile
    itemsize = jnp.dtype(user_table.dtype).itemsize

    vmem_limit = int(min(4 * b_tile * dim * itemsize + (4 << 20), 96 << 20))
    cost = pl.CostEstimate(
        flops=3 * padded * dim,
        transcendentals=0,
        bytes_accessed=2 * padded * dim * itemsize + 2 * padded * 4 + padded * 4)

    grid_spec = pltpu.PrefetchScalarGridSpec(
        num_scalar_prefetch=2,
        grid=(num_tiles,),
        in_specs=[
            pl.BlockSpec(memory_space=pl.ANY),     # user table stays in HBM
            pl.BlockSpec(memory_space=pl.ANY),     # item table stays in HBM
        ],
        out_specs=pl.BlockSpec((b_tile, 1), lambda t, u, i: (t, 0)),
        scratch_shapes=[
            pltpu.VMEM((b_tile, dim), user_table.dtype),
            pltpu.VMEM((b_tile, dim), item_table.dtype),
            pltpu.SemaphoreType.DMA((2,)),
        ],
    )

    out = pl.pallas_call(
        _mf_gather_kernel,
        out_shape=jax.ShapeDtypeStruct((padded, 1), jnp.float32),
        grid_spec=grid_spec,
        compiler_params=pltpu.CompilerParams(
            dimension_semantics=("arbitrary",),
            vmem_limit_bytes=vmem_limit),
        cost_estimate=cost,
    )(uids_flat, iids_flat, user_table, item_table)
    return out.reshape(padded)


# ---------------------------------------------------------------------------
# Public entry point.
# ---------------------------------------------------------------------------

def matrix_factorization_forward(user_table, item_table, user_ids, item_ids,
                                 *, b_tile=256, force_gather=False):
    """ratings[b] = sum_d user_table[user_ids[b], d] * item_table[item_ids[b], d]"""
    batch = user_ids.shape[0]
    num_users, dim = user_table.shape
    num_items, _ = item_table.shape

    # Lane-dense batch tiles; small batches collapse to a single 128-lane tile.
    b_tile = int(max(128, min(b_tile, pl.next_power_of_2(max(batch, 1)))))
    num_tiles = pl.cdiv(batch, b_tile)
    padded = num_tiles * b_tile
    pad = padded - batch

    # Pad ids with 0 (an in-bounds id): padded lanes gather row 0 of both
    # tables, which is benign because those lanes are sliced off below.
    # Do NOT "fix" this into an out-of-bounds id.
    uids = jnp.pad(user_ids.astype(jnp.int32), (0, pad))
    iids = jnp.pad(item_ids.astype(jnp.int32), (0, pad))

    # Resident one-hot path only while bf16 tables + (N, B_TILE) one-hots fit
    # comfortably in VMEM on every generation (v7x: 64 MiB per TensorCore) and
    # the O(N * B_TILE * D) one-hot matmul stays cheap vs. a direct DMA gather.
    table_bytes = (num_users + num_items) * dim * 2
    onehot_bytes = (num_users + num_items) * b_tile * 2
    use_resident = (not force_gather
                    and max(num_users, num_items) <= 16384
                    and table_bytes + onehot_bytes <= 24 * 1024 * 1024)

    if use_resident:
        out = _mf_resident_forward(user_table, item_table,
                                   uids.reshape(1, padded),
                                   iids.reshape(1, padded),
                                   num_tiles, b_tile)
    else:
        out = _mf_gather_forward(user_table, item_table, uids, iids,
                                 num_tiles, b_tile)
    return out[:batch]


if __name__ == "__main__":
    num_users = 64
    num_items = 128
    embedding_dim = 32
    batch = 8

    key = jax.random.PRNGKey(0)
    k_u, k_i, k_uid, k_iid = jax.random.split(key, 4)

    # nn.init.normal_(weight, std=0.01)
    user_table = (jax.random.normal(k_u, (num_users, embedding_dim),
                                    dtype=jnp.float32) * 0.01)
    item_table = (jax.random.normal(k_i, (num_items, embedding_dim),
                                    dtype=jnp.float32) * 0.01)

    user_ids = jax.random.randint(k_uid, (batch,), 0, num_users, dtype=jnp.int32)
    item_ids = jax.random.randint(k_iid, (batch,), 0, num_items, dtype=jnp.int32)

    # Plain-JAX references: full f32, and bf16-quantized tables (what the
    # resident bf16 path computes exactly).
    ref_f32 = jnp.sum(user_table[user_ids] * item_table[item_ids], axis=1)
    ut_b = user_table.astype(jnp.bfloat16).astype(jnp.float32)
    it_b = item_table.astype(jnp.bfloat16).astype(jnp.float32)
    ref_bf16 = jnp.sum(ut_b[user_ids] * it_b[item_ids], axis=1)

    # Path 1: VMEM-resident tables + one-hot MXU gather (default dispatch).
    ratings = jax.block_until_ready(
        matrix_factorization_forward(user_table, item_table,
                                     user_ids, item_ids))
    assert ratings.shape == (batch,)
    assert jnp.allclose(ratings, ref_bf16, atol=1e-6, rtol=1e-5)
    assert jnp.allclose(ratings, ref_f32, atol=1e-4, rtol=0.0)

    # Path 2: large-table fallback -- tables in HBM, per-row DMA gather (f32).
    ratings_g = jax.block_until_ready(
        matrix_factorization_forward(user_table, item_table,
                                     user_ids, item_ids, force_gather=True))
    assert ratings_g.shape == (batch,)
    assert jnp.allclose(ratings_g, ref_f32, atol=1e-6, rtol=1e-5)

    print("KERNEL_OK")
</pallas_src>

<mosaic_0001>
module attributes {stable_mosaic.version = 11 : i64} {
  func.func @_mf_resident_kernel(%arg0: i32, %arg1: memref<1x128xi32, #tpu.memory_space<vmem>>, %arg2: memref<1x128xi32, #tpu.memory_space<vmem>>, %arg3: memref<64x32xbf16, #tpu.memory_space<vmem>>, %arg4: memref<128x32xbf16, #tpu.memory_space<vmem>>, %arg5: memref<1x128xf32, #tpu.memory_space<vmem>>) attributes {dimension_semantics = [#tpu.dimension_semantics<parallel>], iteration_bounds = array<i64: 1>, scalar_prefetch = 0 : i64, scratch_operands = 0 : i64, tpu.core_type = #tpu.core_type<tc>, window_params = [{transform_indices = @transform_0, window_bounds = array<i64: 1, 128>}, {transform_indices = @transform_1, window_bounds = array<i64: 1, 128>}, {pipeline_mode = #tpu.pipeline_mode<synchronous>, transform_indices = @transform_2, window_bounds = array<i64: 64, 32>}, {pipeline_mode = #tpu.pipeline_mode<synchronous>, transform_indices = @transform_3, window_bounds = array<i64: 128, 32>}, {transform_indices = @transform_4, window_bounds = array<i64: 1, 128>}]} {
    %c0 = arith.constant 0 : index
    %c0_0 = arith.constant 0 : index
    %0 = vector.load %arg1[%c0, %c0_0] : memref<1x128xi32, #tpu.memory_space<vmem>>, vector<1x128xi32>
    %c0_1 = arith.constant 0 : index
    %c0_2 = arith.constant 0 : index
    %1 = vector.load %arg2[%c0_1, %c0_2] : memref<1x128xi32, #tpu.memory_space<vmem>>, vector<1x128xi32>
    %c0_3 = arith.constant 0 : index
    %c0_4 = arith.constant 0 : index
    %2 = vector.load %arg3[%c0_3, %c0_4] : memref<64x32xbf16, #tpu.memory_space<vmem>>, vector<64x32xbf16>
    %c0_5 = arith.constant 0 : index
    %c0_6 = arith.constant 0 : index
    %3 = vector.load %arg4[%c0_5, %c0_6] : memref<128x32xbf16, #tpu.memory_space<vmem>>, vector<128x32xbf16>
    %4 = tpu.iota {dimensions = array<i32: 0>} : vector<64x128xi32>
    %5 = vector.broadcast %0 : vector<1x128xi32> to vector<64x128xi32>
    %6 = arith.cmpi eq, %4, %5 : vector<64x128xi32>
    %7 = arith.extui %6 : vector<64x128xi1> to vector<64x128xi32>
    %8 = arith.sitofp %7 : vector<64x128xi32> to vector<64x128xf32>
    %9 = arith.truncf %8 : vector<64x128xf32> to vector<64x128xbf16>
    %10 = tpu.iota {dimensions = array<i32: 0>} : vector<128x128xi32>
    %11 = vector.broadcast %1 : vector<1x128xi32> to vector<128x128xi32>
    %12 = arith.cmpi eq, %10, %11 : vector<128x128xi32>
    %13 = arith.extui %12 : vector<128x128xi1> to vector<128x128xi32>
    %14 = arith.sitofp %13 : vector<128x128xi32> to vector<128x128xf32>
    %15 = arith.truncf %14 : vector<128x128xf32> to vector<128x128xbf16>
    %cst = arith.constant dense<0.000000e+00> : vector<32x128xf32>
    %16 = tpu.matmul %2, %9, %cst {dimension_numbers = #tpu.dot_dimension_numbers<[0], [0], [1], [1], [0, 1, 1, 1], [], []>} : vector<64x32xbf16>, vector<64x128xbf16>, vector<32x128xf32> -> vector<32x128xf32>
    %cst_7 = arith.constant dense<0.000000e+00> : vector<32x128xf32>
    %17 = tpu.matmul %3, %15, %cst_7 {dimension_numbers = #tpu.dot_dimension_numbers<[0], [0], [1], [1], [0, 1, 1, 1], [], []>} : vector<128x32xbf16>, vector<128x128xbf16>, vector<32x128xf32> -> vector<32x128xf32>
    %18 = arith.mulf %16, %17 : vector<32x128xf32>
    %cst_8 = arith.constant dense<0.000000e+00> : vector<128xf32>
    %19 = vector.multi_reduction <add>, %18, %cst_8 [0] : vector<32x128xf32> to vector<128xf32>
    %20 = vector.shape_cast %19 : vector<128xf32> to vector<1x128xf32>
    %c0_9 = arith.constant 0 : index
    %c0_10 = arith.constant 0 : index
    %21 = vector.load %arg5[%c0_9, %c0_10] : memref<1x128xf32, #tpu.memory_space<vmem>>, vector<1x128xf32>
    tpu.vector_store %arg5[%c0_9, %c0_10], %20 {strides = array<i32>} : memref<1x128xf32, #tpu.memory_space<vmem>>, vector<1x128xf32>,
    return
  }
  func.func @transform_0(%arg0: i32) -> (i32, i32) {
    %c0_i32 = arith.constant 0 : i32
    %c0_i32_0 = arith.constant 0 : i32
    return %c0_i32, %arg0 : i32, i32
  }
  func.func @transform_1(%arg0: i32) -> (i32, i32) {
    %c0_i32 = arith.constant 0 : i32
    %c0_i32_0 = arith.constant 0 : i32
    return %c0_i32, %arg0 : i32, i32
  }
  func.func @transform_2(%arg0: i32) -> (i32, i32) {
    %c0_i32 = arith.constant 0 : i32
    %c0_i32_0 = arith.constant 0 : i32
    %c0_i32_1 = arith.constant 0 : i32
    return %c0_i32, %c0_i32_0 : i32, i32
  }
  func.func @transform_3(%arg0: i32) -> (i32, i32) {
    %c0_i32 = arith.constant 0 : i32
    %c0_i32_0 = arith.constant 0 : i32
    %c0_i32_1 = arith.constant 0 : i32
    return %c0_i32, %c0_i32_0 : i32, i32
  }
  func.func @transform_4(%arg0: i32) -> (i32, i32) {
    %c0_i32 = arith.constant 0 : i32
    %c0_i32_0 = arith.constant 0 : i32
    return %c0_i32, %arg0 : i32, i32
  }
}

</mosaic_0001>

<llo_original>
// kernel: tpu_custom_call.1
$region0: #{tpu_custom_call.1}
  #allocation0 [shape = 'u32[]', space=smem, size = 0x4, offset = 0x4, fixed_abs, tag = 'smem constant byte address 0x4 - core index']
  #allocation1 [shape = 'u32[72,128]{1,0:T(1,128)}', space=vmem, size = 0x9000, scoped, tag = 'internal scratch']
  %s0 = inlined_call_operand.vmem [shape: s32[1,128], index: 0, kind: input, shape index: {}]
  %s1 = inlined_call_operand.vmem [shape: s32[1,128], index: 1, kind: input, shape index: {}]
  %s2 = inlined_call_operand.vmem [shape: bf16[64,32], index: 2, kind: input, shape index: {}]
  %s3 = inlined_call_operand.vmem [shape: bf16[128,32], index: 3, kind: input, shape index: {}]
  %s4 = inlined_call_operand.hbm [shape: f32[1,128], index: 4, kind: output, shape index: {}]
  %s5 = sld [smem:[#allocation0]]
  $region26: #{tpu_custom_call.1} parent=0
    _
  %s7 = ssub.s32 1, %s5
  %s8 = scalar_select 0, %s7, %s5
  $region1: #{tpu_custom_call.1} parent=0
    #allocation2 [shape = 'u8[512]{0}', space=vmem, size = 0x400, scoped, tag = 'output window, operand 0, single buffered']
    #allocation3 [shape = 's32[1]{0}', space=sflag, size = 0x4, scoped, tag = 'scoped memory for tpu_custom_call.1']
    %9 = vsyncpa [#allocation3], 0
    // Predicated region
    $region2: #{tpu_custom_call.1} parent=1 // pred_check
      _
    $region3: #{tpu_custom_call.1} parent=1 // pred_check_branch
      %11 = sbr.rel (0) target = $region5
    $region4: #{tpu_custom_call.1} parent=1 // pred_region
      _
    $region5: #{tpu_custom_call.1} parent=1 // pred_fallthru
      _
    // Predicated region
    $region6: #{tpu_custom_call.1} parent=1 // pred_check
      _
    $region7: #{tpu_custom_call.1} parent=1 // pred_check_branch
      %13 = sbr.rel (0) target = $region9
    $region8: #{tpu_custom_call.1} parent=1 // pred_region
      _
    $region9: #{tpu_custom_call.1} parent=1 // pred_fallthru
      _
    // Predicated region
    $region10: #{tpu_custom_call.1} parent=1 // pred_check
      _
    $region11: #{tpu_custom_call.1} parent=1 // pred_check_branch
      %15 = sbr.rel (0) target = $region13
    $region12: #{tpu_custom_call.1} parent=1 // pred_region
      _
    $region13: #{tpu_custom_call.1} parent=1 // pred_fallthru
      _
    // Predicated region
    $region14: #{tpu_custom_call.1} parent=1 // pred_check
      _
    $region15: #{tpu_custom_call.1} parent=1 // pred_check_branch
      %17 = sbr.rel (0) target = $region17
    $region16: #{tpu_custom_call.1} parent=1 // pred_region
      _
    $region17: #{tpu_custom_call.1} parent=1 // pred_fallthru
      _
    %v19 = vld [vmem:[%s0] sm:$0x1]
    %v20 = vld [vmem:[%s1] sm:$0x1]
    %v21 = vld [vmem:[%s2] sm:$0xf]
    %v22 = vld [vmem:[%s2 + $0x4] sm:$0xf]
    %v23 = vld [vmem:[%s2 + $0x8] sm:$0xf]
    %v24 = vld [vmem:[%s2 + $0xc] sm:$0xf]
    %v25 = vld [vmem:[%s2 + $0x10] sm:$0xf]
    %v26 = vld [vmem:[%s2 + $0x14] sm:$0xf]
    %v27 = vld [vmem:[%s2 + $0x18] sm:$0xf]
    %v28 = vld [vmem:[%s2 + $0x1c] sm:$0xf]
    %v29 = vld [vmem:[%s3] sm:$0xf]
    %v30 = vld [vmem:[%s3 + $0x4] sm:$0xf]
    %v31 = vld [vmem:[%s3 + $0x8] sm:$0xf]
    %v32 = vld [vmem:[%s3 + $0xc] sm:$0xf]
    %v33 = vld [vmem:[%s3 + $0x10] sm:$0xf]
    %v34 = vld [vmem:[%s3 + $0x14] sm:$0xf]
    %v35 = vld [vmem:[%s3 + $0x18] sm:$0xf]
    %v36 = vld [vmem:[%s3 + $0x1c] sm:$0xf]
    %v37 = vld [vmem:[%s3 + $0x20] sm:$0xf]
    %v38 = vld [vmem:[%s3 + $0x24] sm:$0xf]
    %v39 = vld [vmem:[%s3 + $0x28] sm:$0xf]
    %v40 = vld [vmem:[%s3 + $0x2c] sm:$0xf]
    %v41 = vld [vmem:[%s3 + $0x30] sm:$0xf]
    %v42 = vld [vmem:[%s3 + $0x34] sm:$0xf]
    %v43 = vld [vmem:[%s3 + $0x38] sm:$0xf]
    %v44 = vld [vmem:[%s3 + $0x3c] sm:$0xf]
    %v45 = vlaneseq
    %v46 = vshrl.u32 %v45, 7
    %v47 = vadd.s32 %v46, 8
    %v48 = vadd.s32 %v46, 16
    %v49 = vadd.s32 %v46, 24
    %v50 = vadd.s32 %v46, 32
    %v51 = vadd.s32 %v46, 40
    %v52 = vadd.s32 %v46, 48
    %v53 = vadd.s32 %v46, 56
    %v54 = vperm.slane %v19, 0
    %vm55 = vcmp.eq.s32.totalorder %v46, %v54
    %vm56 = vcmp.eq.s32.totalorder %v47, %v54
    %vm57 = vcmp.eq.s32.totalorder %v48, %v54
    %vm58 = vcmp.eq.s32.totalorder %v49, %v54
    %vm59 = vcmp.eq.s32.totalorder %v50, %v54
    %vm60 = vcmp.eq.s32.totalorder %v51, %v54
    %vm61 = vcmp.eq.s32.totalorder %v52, %v54
    %vm62 = vcmp.eq.s32.totalorder %v53, %v54
    %v63 = vsel %vm55, 1, 0
    %v64 = vsel %vm56, 1, 0
    %v65 = vsel %vm57, 1, 0
    %v66 = vsel %vm58, 1, 0
    %v67 = vsel %vm59, 1, 0
    %v68 = vsel %vm60, 1, 0
    %v69 = vsel %vm61, 1, 0
    %v70 = vsel %vm62, 1, 0
    %v71 = vcvt.s32.f32 %v63
    %v72 = vcvt.s32.f32 %v64
    %v73 = vcvt.s32.f32 %v65
    %v74 = vcvt.s32.f32 %v66
    %v75 = vcvt.s32.f32 %v67
    %v76 = vcvt.s32.f32 %v68
    %v77 = vcvt.s32.f32 %v69
    %v78 = vcvt.s32.f32 %v70
    %v79 = vpack.c.bf16 %v72, %v71
    %v80 = vpack.c.bf16 %v74, %v73
    %v81 = vpack.c.bf16 %v76, %v75
    %v82 = vpack.c.bf16 %v78, %v77
    %v83 = vadd.s32 %v46, 64
    %v84 = vadd.s32 %v46, 72
    %v85 = vadd.s32 %v46, 80
    %v86 = vadd.s32 %v46, 88
    %v87 = vadd.s32 %v46, 96
    %v88 = vadd.s32 %v46, 104
    %v89 = vadd.s32 %v46, 112
    %v90 = vadd.s32 %v46, 120
    %v91 = vperm.slane %v20, 0
    %vm92 = vcmp.eq.s32.totalorder %v46, %v91
    %vm93 = vcmp.eq.s32.totalorder %v47, %v91
    %vm94 = vcmp.eq.s32.totalorder %v48, %v91
    %vm95 = vcmp.eq.s32.totalorder %v49, %v91
    %vm96 = vcmp.eq.s32.totalorder %v50, %v91
    %vm97 = vcmp.eq.s32.totalorder %v51, %v91
    %vm98 = vcmp.eq.s32.totalorder %v52, %v91
    %vm99 = vcmp.eq.s32.totalorder %v53, %v91
    %vm100 = vcmp.eq.s32.totalorder %v83, %v91
    %vm101 = vcmp.eq.s32.totalorder %v84, %v91
    %vm102 = vcmp.eq.s32.totalorder %v85, %v91
    %vm103 = vcmp.eq.s32.totalorder %v86, %v91
    %vm104 = vcmp.eq.s32.totalorder %v87, %v91
    %vm105 = vcmp.eq.s32.totalorder %v88, %v91
    %vm106 = vcmp.eq.s32.totalorder %v89, %v91
    %vm107 = vcmp.eq.s32.totalorder %v90, %v91
    %v108 = vsel %vm92, 1, 0
    %v109 = vsel %vm93, 1, 0
    %v110 = vsel %vm94, 1, 0
    %v111 = vsel %vm95, 1, 0
    %v112 = vsel %vm96, 1, 0
    %v113 = vsel %vm97, 1, 0
    %v114 = vsel %vm98, 1, 0
    %v115 = vsel %vm99, 1, 0
    %v116 = vsel %vm100, 1, 0
    %v117 = vsel %vm101, 1, 0
    %v118 = vsel %vm102, 1, 0
    %v119 = vsel %vm103, 1, 0
    %v120 = vsel %vm104, 1, 0
    %v121 = vsel %vm105, 1, 0
    %v122 = vsel %vm106, 1, 0
    %v123 = vsel %vm107, 1, 0
    %v124 = vcvt.s32.f32 %v108
    %v125 = vcvt.s32.f32 %v109
    %v126 = vcvt.s32.f32 %v110
    %v127 = vcvt.s32.f32 %v111
    %v128 = vcvt.s32.f32 %v112
    %v129 = vcvt.s32.f32 %v113
    %v130 = vcvt.s32.f32 %v114
    %v131 = vcvt.s32.f32 %v115
    %v132 = vcvt.s32.f32 %v116
    %v133 = vcvt.s32.f32 %v117
    %v134 = vcvt.s32.f32 %v118
    %v135 = vcvt.s32.f32 %v119
    %v136 = vcvt.s32.f32 %v120
    %v137 = vcvt.s32.f32 %v121
    %v138 = vcvt.s32.f32 %v122
    %v139 = vcvt.s32.f32 %v123
    %v140 = vpack.c.bf16 %v125, %v124
    %v141 = vpack.c.bf16 %v127, %v126
    %v142 = vpack.c.bf16 %v129, %v128
    %v143 = vpack.c.bf16 %v131, %v130
    %v144 = vpack.c.bf16 %v133, %v132
    %v145 = vpack.c.bf16 %v135, %v134
    %v146 = vpack.c.bf16 %v137, %v136
    %v147 = vpack.c.bf16 %v139, %v138
    %v156 = vunpack.c.l.b16 %v21
    %v157 = vunpack.c.l.b16 %v22
    %v158 = vunpack.c.l.b16 %v23
    %v159 = vunpack.c.l.b16 %v24
    %v160 = vunpack.c.l.b16 %v25
    %v161 = vunpack.c.l.b16 %v26
    %v162 = vunpack.c.l.b16 %v27
    %v163 = vunpack.c.l.b16 %v28
    %v164 = vpack.c.b16 %v157, %v156
    %v165 = vpack.c.b16 %v159, %v158
    %v166 = vpack.c.b16 %v161, %v160
    %v167 = vpack.c.b16 %v163, %v162
    %172 = vxpose.xlu0.c.b16.start [1/8] %v164, 128
    %173 = vxpose.xlu0.c.b16.cont [2/8] %v165, 128
    %174 = vxpose.xlu0.c.b16.cont [3/8] %v166, 128
    %175 = vxpose.xlu0.c.b16.cont [4/8] %v167, 128
    %176 = vxpose.xlu0.c.b16.cont [5/8] 0, 128
    %177 = vxpose.xlu0.c.b16.cont [6/8] 0, 128
    %178 = vxpose.xlu0.c.b16.cont [7/8] 0, 128
    %179 = vxpose.xlu0.c.b16.end [8/8] 0, 128
    %v180 = vpop.trf.xlu0
    %v181 = vpop.trf.xlu0
    %v182 = vpop.trf.xlu0
    %v183 = vpop.trf.xlu0
    %v184 = vpop.trf.xlu0
    %v185 = vpop.trf.xlu0
    %v186 = vpop.trf.xlu0
    %v187 = vpop.trf.xlu0
    %vm188 = vcmask 523264
    %v190 = vsel %vm188, %v180, 0
    %v193 = vsel %vm188, %v181, 0
    %195 = vmatpush.bf16.msra.mxu0 0
    %196 = vmatpush.bf16.msra.mxu0 0
    %197 = vmatpush.bf16.msra.mxu0 0
    %198 = vmatpush.bf16.msra.mxu0 0
    %199 = vmatpush.bf16.msra.mxu0 %v82
    %200 = vmatpush.bf16.msra.mxu0 %v81
    %201 = vmatpush.bf16.msra.mxu0 %v80
    %202 = vmatpush.bf16.msra.mxu0 %v79
    %203 = vmatmul.bf16.gmra.mxu0 %v190
    %v204 = vpop.f32.mrf.mxu0
    %v205 = vadd.f32 0.0, %v204
    %v206 = vpop.f32.mrf.mxu0
    %v207 = vadd.f32 0.0, %v206
    %208 = vmatmul.bf16.gmra.mxu0 %v193
    %v209 = vpop.f32.mrf.mxu0
    %v210 = vadd.f32 0.0, %v209
    %v211 = vpop.f32.mrf.mxu0
    %v212 = vadd.f32 0.0, %v211
    %213 = vdwg.mxu0
    %v230 = vunpack.c.l.b16 %v29
    %v231 = vunpack.c.l.b16 %v30
    %v232 = vunpack.c.l.b16 %v31
    %v233 = vunpack.c.l.b16 %v32
    %v234 = vunpack.c.l.b16 %v33
    %v235 = vunpack.c.l.b16 %v34
    %v236 = vunpack.c.l.b16 %v35
    %v237 = vunpack.c.l.b16 %v36
    %v238 = vunpack.c.l.b16 %v37
    %v239 = vunpack.c.l.b16 %v38
    %v240 = vunpack.c.l.b16 %v39
    %v241 = vunpack.c.l.b16 %v40
    %v242 = vunpack.c.l.b16 %v41
    %v243 = vunpack.c.l.b16 %v42
    %v244 = vunpack.c.l.b16 %v43
    %v245 = vunpack.c.l.b16 %v44
    %v246 = vpack.c.b16 %v231, %v230
    %v247 = vpack.c.b16 %v233, %v232
    %v248 = vpack.c.b16 %v235, %v234
    %v249 = vpack.c.b16 %v237, %v236
    %v250 = vpack.c.b16 %v239, %v238
    %v251 = vpack.c.b16 %v241, %v240
    %v252 = vpack.c.b16 %v243, %v242
    %v253 = vpack.c.b16 %v245, %v244
    %262 = vxpose.xlu0.c.b16.start [1/8] %v246, 128
    %263 = vxpose.xlu0.c.b16.cont [2/8] %v247, 128
    %264 = vxpose.xlu0.c.b16.cont [3/8] %v248, 128
    %265 = vxpose.xlu0.c.b16.cont [4/8] %v249, 128
    %266 = vxpose.xlu0.c.b16.cont [5/8] %v250, 128
    %267 = vxpose.xlu0.c.b16.cont [6/8] %v251, 128
    %268 = vxpose.xlu0.c.b16.cont [7/8] %v252, 128
    %269 = vxpose.xlu0.c.b16.end [8/8] %v253, 128
    %v270 = vpop.trf.xlu0
    %v271 = vpop.trf.xlu0
    %v272 = vpop.trf.xlu0
    %v273 = vpop.trf.xlu0
    %v274 = vpop.trf.xlu0
    %v275 = vpop.trf.xlu0
    %v276 = vpop.trf.xlu0
    %v277 = vpop.trf.xlu0
    %278 = vmatpush.bf16.msra.mxu0 %v147
    %279 = vmatpush.bf16.msra.mxu0 %v146
    %280 = vmatpush.bf16.msra.mxu0 %v145
    %281 = vmatpush.bf16.msra.mxu0 %v144
    %282 = vmatpush.bf16.msra.mxu0 %v143
    %283 = vmatpush.bf16.msra.mxu0 %v142
    %284 = vmatpush.bf16.msra.mxu0 %v141
    %285 = vmatpush.bf16.msra.mxu0 %v140
    %286 = vmatmul.bf16.gmra.mxu0 %v270
    %v287 = vpop.f32.mrf.mxu0
    %v288 = vadd.f32 0.0, %v287
    %v289 = vpop.f32.mrf.mxu0
    %v290 = vadd.f32 0.0, %v289
    %291 = vmatmul.bf16.gmra.mxu0 %v271
    %v292 = vpop.f32.mrf.mxu0
    %v293 = vadd.f32 0.0, %v292
    %v294 = vpop.f32.mrf.mxu0
    %v295 = vadd.f32 0.0, %v294
    %296 = vdwg.mxu0
    %v297 = vmul.f32 %v205, %v288
    %v298 = vmul.f32 %v207, %v290
    %v299 = vmul.f32 %v210, %v293
    %v300 = vmul.f32 %v212, %v295
    %v301 = vadd.f32 %v297, %v298
    %v302 = vadd.f32 %v301, %v299
    %v303 = vadd.f32 %v302, %v300
    %v304 = vrot.slane %v303, 4
    %v305 = vadd.f32 %v303, %v304
    %v306 = vrot.slane %v305, 2
    %v307 = vadd.f32 %v305, %v306
    %v308 = vrot.slane %v307, 1
    %v309 = vadd.f32 %v307, %v308
    %310 = vst [vmem:[#allocation2] sm:$0x1] %v309
    // Predicated region
    $region18: #{tpu_custom_call.1} parent=1 // pred_check
      _
    $region19: #{tpu_custom_call.1} parent=1 // pred_check_branch
      %312 = sbr.rel (0) target = $region21
    $region20: #{tpu_custom_call.1} parent=1 // pred_region
      %314 = vsyncadd [#allocation3], 0
      %s316 = sshll.u32 [#allocation2], 4
      %s317 = int_to_ptr.vmem [resolvable:$true] %s316
      %s318 = sshll.u32 %s4, 4
      %s319 = int_to_ptr.hbm [resolvable:$true] %s318
      %321 = dma.vmem_to_hbm [thread:$0]  %s317, 16, %s319, [#allocation3]
    $region21: #{tpu_custom_call.1} parent=1 // pred_fallthru
      _
    // Predicated region
    $region22: #{tpu_custom_call.1} parent=1 // pred_check
      _
    $region23: #{tpu_custom_call.1} parent=1 // pred_check_branch
      %323 = sbr.rel (0) target = $region25
    $region24: #{tpu_custom_call.1} parent=1 // pred_region
      %325 = dma.done [#allocation3], 16
    $region25: #{tpu_custom_call.1} parent=1 // pred_fallthru
      _
    %326 = vsyncpa [#allocation3], 1

</llo_original>
